<compile_context>
chip_gen: v7x
topology: tpu7x:2x2x1
jax: 0.10.0
libtpu: 0.0.40
codegen_flags: <defaults>
</compile_context>

<pallas_src>
import functools

import jax
import jax.numpy as jnp
from jax.experimental import pallas as pl
from jax.experimental.pallas import tpu as pltpu

GEM_P = 3.0        # GeM default p
GEM_EPS = 1e-6     # GeM clamp eps
L2_EPS = 1e-12     # F.normalize eps


# ---------------- Pallas kernels ----------------

def _conv_matmul_kernel(p_ref, w_ref, b_ref, o_ref):
    """One (tm, K) x (K, tn) tile of the im2col conv: matmul + bias + ReLU."""
    acc = jnp.dot(p_ref[...], w_ref[...], preferred_element_type=jnp.float32)
    acc = acc + b_ref[...]
    o_ref[...] = jnp.maximum(acc, 0.0).astype(o_ref.dtype)


def _gem_pool_kernel(x_ref, o_ref, *, inv_hw):
    """GeM over HW for one image, streamed in HW tiles.

    x_ref: (1, thw, C) bf16 features of one image's HW tile.
    o_ref: (1, 1, C) f32 accumulator / pooled output (resident across the HW axis).
    torch semantics: F.normalize(x, dim=C) -> clamp(eps) -> ^p -> mean over HW -> ^(1/p)
    """
    s = pl.program_id(1)

    @pl.when(s == 0)
    def _():
        o_ref[...] = jnp.zeros_like(o_ref)

    x = x_ref[0].astype(jnp.float32)                                # (thw, C)

    # L2Norm over channels: 1 rsqrt per row instead of HW*C divides.
    sumsq = jnp.sum(x * x, axis=-1, keepdims=True)
    inv = jax.lax.rsqrt(jnp.maximum(sumsq, L2_EPS * L2_EPS))
    xn = jnp.maximum(x * inv, GEM_EPS)

    # x^p with p=3 as two VPU muls (no exp/log on the EUP).
    o_ref[...] += jnp.sum(xn * xn * xn, axis=0)[None, None, :]

    @pl.when(s == pl.num_programs(1) - 1)
    def _():
        mean = o_ref[...] * inv_hw                                  # (1, 1, C)
        # ^(1/p) only on C elements -> negligible EUP cost.
        o_ref[...] = jnp.power(mean, 1.0 / GEM_P)


def _head_kernel(p_ref, w_ref, b_ref, o_ref):
    """Batched head: (N, C) @ (C, Dout) + bias, then exact f32 L2Norm per row."""
    p = p_ref[...].astype(jnp.bfloat16)
    y = jnp.dot(p, w_ref[...], preferred_element_type=jnp.float32) + b_ref[...]
    norm = jnp.maximum(jnp.sqrt(jnp.sum(y * y, axis=-1, keepdims=True)), L2_EPS)
    o_ref[...] = y / norm


# ---------------- JAX glue (im2col, tiling, wrapper) ----------------

def _im2col(x_nchw, kh, kw, stride, pad):
    """Extract conv patches; column ordering matches PyTorch weight.reshape(Cout, -1)."""
    n, c, h, w = x_nchw.shape
    xp = jnp.pad(x_nchw, ((0, 0), (0, 0), (pad, pad), (pad, pad)))
    ho = (h + 2 * pad - kh) // stride + 1
    wo = (w + 2 * pad - kw) // stride + 1
    cols = []
    for i in range(kh):
        for j in range(kw):
            cols.append(xp[:, :, i:i + stride * ho:stride, j:j + stride * wo:stride])
    p = jnp.stack(cols, axis=2)                       # (N, C, kh*kw, Ho, Wo)
    p = p.transpose(0, 3, 4, 1, 2).reshape(n * ho * wo, c * kh * kw)
    return p, ho, wo


def _pick_tile(dim, pref, quantum):
    """Largest multiple of `quantum` <= pref that divides dim; else full dim."""
    if dim <= pref:
        return dim
    t = (pref // quantum) * quantum
    while t >= quantum:
        if dim % t == 0:
            return t
        t -= quantum
    return dim


def geo_localization_forward(x, conv_w, conv_b, fc_w, fc_b):
    """x: (N, 3, H, W) float32 -> (N, fc_output_dim) unit-norm descriptors."""
    n = x.shape[0]
    cfeat = conv_w.shape[0]
    dout = fc_w.shape[0]

    # --- backbone stand-in: 3x3 stride-2 conv + ReLU, as tiled Pallas matmul ---
    patches, ho, wo = _im2col(x, 3, 3, stride=2, pad=1)
    m, k = patches.shape
    w_mat = conv_w.reshape(cfeat, k).T                # (K, Cfeat)

    patches_bf = patches.astype(jnp.bfloat16)         # MXU-native operands
    w_bf = w_mat.astype(jnp.bfloat16)

    tm = _pick_tile(m, 256, 8)                        # fits v7x 32 MiB scoped VMEM
    tn = _pick_tile(cfeat, 256, 128)
    grid_conv = (m // tm, cfeat // tn)

    feat_flat = pl.pallas_call(
        _conv_matmul_kernel,
        out_shape=jax.ShapeDtypeStruct((m, cfeat), jnp.bfloat16),
        grid=grid_conv,
        in_specs=[pl.BlockSpec((tm, k), lambda i, j: (i, 0)),
                  pl.BlockSpec((k, tn), lambda i, j: (0, j)),
                  pl.BlockSpec((1, tn), lambda i, j: (0, j))],
        out_specs=pl.BlockSpec((tm, tn), lambda i, j: (i, j)),
        compiler_params=pltpu.CompilerParams(
            dimension_semantics=("parallel", "parallel")),
    )(patches_bf, w_bf, conv_b[None, :])

    hw = ho * wo
    feat = feat_flat.reshape(n, hw, cfeat)            # (N, HW, C), C on lanes

    # --- GeM pooling streamed over HW tiles (bounded VMEM, pipelined DMA) ---
    thw = _pick_tile(hw, 128, 8)
    grid_gem = (n, hw // thw)

    pooled = pl.pallas_call(
        functools.partial(_gem_pool_kernel, inv_hw=1.0 / hw),
        out_shape=jax.ShapeDtypeStruct((n, 1, cfeat), jnp.float32),
        grid=grid_gem,
        in_specs=[pl.BlockSpec((1, thw, cfeat), lambda b, s: (b, s, 0))],
        out_specs=pl.BlockSpec((1, 1, cfeat), lambda b, s: (b, 0, 0)),
        compiler_params=pltpu.CompilerParams(
            dimension_semantics=("parallel", "arbitrary")),
    )(feat)

    # --- head: one batched Linear for all N images + final L2Norm ---
    out = pl.pallas_call(
        _head_kernel,
        out_shape=jax.ShapeDtypeStruct((n, dout), jnp.float32),
        in_specs=[pl.BlockSpec((n, cfeat), lambda: (0, 0)),
                  pl.BlockSpec((cfeat, dout), lambda: (0, 0)),
                  pl.BlockSpec((1, dout), lambda: (0, 0))],
        out_specs=pl.BlockSpec((n, dout), lambda: (0, 0)),
    )(pooled.reshape(n, cfeat), fc_w.T.astype(jnp.bfloat16), fc_b[None, :])

    return out                                        # (N, Dout), lane-dense


# ---------------- pure-JAX reference (for correctness check) ----------------

def _reference_forward(x, conv_w, conv_b, fc_w, fc_b):
    n = x.shape[0]
    cfeat = conv_w.shape[0]
    patches, ho, wo = _im2col(x, 3, 3, stride=2, pad=1)
    feat = jnp.maximum(patches @ conv_w.reshape(cfeat, -1).T + conv_b, 0.0)
    feat = feat.reshape(n, ho * wo, cfeat)
    norm = jnp.sqrt(jnp.sum(feat * feat, axis=-1, keepdims=True))
    feat = feat / jnp.maximum(norm, L2_EPS)
    pooled = jnp.mean(jnp.maximum(feat, GEM_EPS) ** GEM_P, axis=1) ** (1.0 / GEM_P)
    y = pooled @ fc_w.T + fc_b
    ynorm = jnp.sqrt(jnp.sum(y * y, axis=-1, keepdims=True))
    return y / jnp.maximum(ynorm, L2_EPS)


# ---------------- demo ----------------

if __name__ == "__main__":
    key = jax.random.PRNGKey(0)
    k1, k2, k3, k4, k5 = jax.random.split(key, 5)

    # Small shapes consistent with the module: NCHW image in, descriptor out.
    N, CIN, H, W = 2, 3, 32, 32
    FEATURES_DIM = 256     # small stand-in for ResNet18's 512
    FC_OUTPUT_DIM = 128    # descriptor dimension

    x = jax.random.normal(k1, (N, CIN, H, W), dtype=jnp.float32)
    conv_w = jax.random.normal(k2, (FEATURES_DIM, CIN, 3, 3), dtype=jnp.float32) * 0.1
    conv_b = jax.random.normal(k3, (FEATURES_DIM,), dtype=jnp.float32) * 0.01
    fc_w = jax.random.normal(k4, (FC_OUTPUT_DIM, FEATURES_DIM), dtype=jnp.float32) * 0.05
    fc_b = jax.random.normal(k5, (FC_OUTPUT_DIM,), dtype=jnp.float32) * 0.01

    out = geo_localization_forward(x, conv_w, conv_b, fc_w, fc_b)
    out = jax.block_until_ready(out)

    assert out.shape == (N, FC_OUTPUT_DIM), out.shape
    # descriptors must be unit L2-norm (final L2Norm layer, computed in f32)
    norms = jnp.linalg.norm(out, axis=-1)
    assert bool(jnp.all(jnp.abs(norms - 1.0) < 1e-4)), norms
    # match the f32 reference to within bf16-matmul tolerance
    ref = _reference_forward(x, conv_w, conv_b, fc_w, fc_b)
    assert bool(jnp.max(jnp.abs(out - ref)) < 3e-2), jnp.max(jnp.abs(out - ref))

    print("KERNEL_OK")
</pallas_src>

<mosaic_0001>
module attributes {stable_mosaic.version = 11 : i64} {
  func.func @_conv_matmul_kernel(%arg0: i32, %arg1: i32, %arg2: memref<256x27xbf16, #tpu.memory_space<vmem>>, %arg3: memref<27x256xbf16, #tpu.memory_space<vmem>>, %arg4: memref<1x256xf32, #tpu.memory_space<vmem>>, %arg5: memref<256x256xbf16, #tpu.memory_space<vmem>>) attributes {dimension_semantics = [#tpu.dimension_semantics<parallel>, #tpu.dimension_semantics<parallel>], iteration_bounds = array<i64: 2, 1>, scalar_prefetch = 0 : i64, scratch_operands = 0 : i64, tpu.core_type = #tpu.core_type<tc>, window_params = [{transform_indices = @transform_0, window_bounds = array<i64: 256, 27>}, {transform_indices = @transform_1, window_bounds = array<i64: 27, 256>}, {transform_indices = @transform_2, window_bounds = array<i64: 1, 256>}, {transform_indices = @transform_3, window_bounds = array<i64: 256, 256>}]} {
    %c0 = arith.constant 0 : index
    %c0_0 = arith.constant 0 : index
    %0 = vector.load %arg2[%c0, %c0_0] : memref<256x27xbf16, #tpu.memory_space<vmem>>, vector<256x27xbf16>
    %c0_1 = arith.constant 0 : index
    %c0_2 = arith.constant 0 : index
    %1 = vector.load %arg3[%c0_1, %c0_2] : memref<27x256xbf16, #tpu.memory_space<vmem>>, vector<27x256xbf16>
    %cst = arith.constant dense<0.000000e+00> : vector<256x256xf32>
    %2 = tpu.matmul %0, %1, %cst {dimension_numbers = #tpu.dot_dimension_numbers<[1], [0], [0], [1], [0, 0, 1, 1], [], []>} : vector<256x27xbf16>, vector<27x256xbf16>, vector<256x256xf32> -> vector<256x256xf32>
    %c0_3 = arith.constant 0 : index
    %c0_4 = arith.constant 0 : index
    %3 = vector.load %arg4[%c0_3, %c0_4] : memref<1x256xf32, #tpu.memory_space<vmem>>, vector<1x256xf32>
    %4 = vector.broadcast %3 : vector<1x256xf32> to vector<256x256xf32>
    %5 = arith.addf %2, %4 : vector<256x256xf32>
    %cst_5 = arith.constant 0.000000e+00 : f32
    %6 = vector.broadcast %cst_5 : f32 to vector<256x256xf32>
    %7 = arith.maximumf %5, %6 : vector<256x256xf32>
    %8 = arith.truncf %7 : vector<256x256xf32> to vector<256x256xbf16>
    %c0_6 = arith.constant 0 : index
    %c0_7 = arith.constant 0 : index
    %9 = vector.load %arg5[%c0_6, %c0_7] : memref<256x256xbf16, #tpu.memory_space<vmem>>, vector<256x256xbf16>
    tpu.vector_store %arg5[%c0_6, %c0_7], %8 {strides = array<i32>} : memref<256x256xbf16, #tpu.memory_space<vmem>>, vector<256x256xbf16>,
    return
  }
  func.func @transform_0(%arg0: i32, %arg1: i32) -> (i32, i32) {
    %c0_i32 = arith.constant 0 : i32
    %c0_i32_0 = arith.constant 0 : i32
    return %arg0, %c0_i32 : i32, i32
  }
  func.func @transform_1(%arg0: i32, %arg1: i32) -> (i32, i32) {
    %c0_i32 = arith.constant 0 : i32
    %c0_i32_0 = arith.constant 0 : i32
    return %c0_i32, %arg1 : i32, i32
  }
  func.func @transform_2(%arg0: i32, %arg1: i32) -> (i32, i32) {
    %c0_i32 = arith.constant 0 : i32
    %c0_i32_0 = arith.constant 0 : i32
    return %c0_i32, %arg1 : i32, i32
  }
  func.func @transform_3(%arg0: i32, %arg1: i32) -> (i32, i32) {
    %c0_i32 = arith.constant 0 : i32
    return %arg0, %arg1 : i32, i32
  }
}

</mosaic_0001>

<llo_original>
// kernel: tpu_custom_call.1
$region0: #{tpu_custom_call.1}
  #allocation0 [shape = 'u32[]', space=smem, size = 0x4, offset = 0x4, fixed_abs, tag = 'smem constant byte address 0x4 - core index']
  #allocation1 [shape = 'u32[144,128]{1,0:T(1,128)}', space=vmem, size = 0x12000, scoped, tag = 'internal scratch']
  %s0 = inlined_call_operand.vmem [shape: bf16[512,27], index: 0, kind: input, shape index: {}]
  %s1 = inlined_call_operand.vmem [shape: bf16[27,256], index: 1, kind: input, shape index: {}]
  %s2 = inlined_call_operand.vmem [shape: f32[1,256], index: 2, kind: input, shape index: {}]
  %s3 = inlined_call_operand.hbm [shape: bf16[512,256], index: 3, kind: output, shape index: {}]
  %s4 = sld [smem:[#allocation0]]
  $region45: #{tpu_custom_call.1} parent=0
    _
  %s6 = ssub.s32 1, %s4
  %s7 = scalar_select 0, %s6, %s4
  $region1: #{tpu_custom_call.1} parent=0
    #allocation2 [shape = 'u8[262144]{0}', space=vmem, size = 0x40000, scoped, tag = 'output window, operand 0']
    #allocation3 [shape = 's32[2]{0}', space=sflag, size = 0x8, scoped, tag = 'scoped memory for tpu_custom_call.1']
    %8 = vsyncpa [#allocation3], 0
    %s9 = scalar_lea.sflag [#allocation3], 1
    %10 = vsyncpa %s9, 0
    loop: start=0, step=1, limit=4
    $region2: #{tpu_custom_call.1} parent=1 // loop_pre_header
      _
    $region3: #{tpu_custom_call.1} parent=1 // loop_header
      %s12 = sphi 0, %s16
      %p13 = scmp.ge.s32.totalorder %s12, 4
      %s19 = sphi 0, %s31
      %s20 = sphi 0, %s27
      %s21 = sphi 0, %s19
      %s22 = sphi 0, %s20
      %s23 = sphi 0, %s21
      %s24 = sphi 0, %s22
      %s34 = sphi 0, %s36
      %s37 = sphi 0, %s34
      %s38 = sphi 0, %s37
      %s54 = sphi 0, %s38
      %s60 = sphi 0, %s62
      %s63 = sphi 0, %s60
      %s64 = sphi 0, %s63
      %s80 = sphi 0, %s64
      %s86 = sphi 0, %s88
      %s89 = sphi 0, %s86
      %s90 = sphi 0, %s89
      %s106 = sphi 0, %s90
      %s114 = sphi 0, %s116
      %s117 = sphi 0, %s114
      %s118 = sphi 0, %s117
      %s134 = sphi 0, %s118
    $region4: #{tpu_custom_call.1} parent=1 // loop_header_branch
      %15 = sbr.rel (%p13) target = $region8
    $region5: #{tpu_custom_call.1} parent=1 // loop_body
      %s17 = ssub.s32 %s12, 1
      %s18 = ssub.s32 %s12, 2
      %s25 = sadd.s32 1, %s20
      %p26 = scmp.ge.s32.totalorder %s25, 1
      %s27 = scalar_select %p26, 0, %s25
      %s28 = sadd.s32 1, %s19
      %s29 = scalar_select %p26, %s28, %s19
      %p30 = scmp.ge.s32.totalorder %s29, 2
      %s31 = scalar_select %p30, 0, %s29
      %s32 = ssub.s32 %s19, %s31
      %p33 = scmp.eq.s32.totalorder %s32, 0
      %s35 = sadd.s32 %s34, 1
      %s36 = scalar_select %p33, %s34, %s35
      %p39 = pneg %p33
      %p40 = scmp.eq.s32.totalorder %s12, 1
      %p41 = por %p39, %p40
      %p42 = scmp.ne.s32.totalorder %s34, %s37
      %p43 = scmp.eq.s32.totalorder %s12, 0
      %p44 = por %p42, %p43
      %p45 = scmp.ne.s32.totalorder %s34, %s37
      %p46 = scmp.eq.s32.totalorder %s17, 1
      %p47 = por %p45, %p46
      %p48 = scmp.ne.s32.totalorder %s37, %s38
      %p49 = scmp.eq.s32.totalorder %s17, 0
      %p50 = por %p48, %p49
      %p51 = scmp.ne.s32.totalorder %s37, %s38
      %p52 = scmp.eq.s32.totalorder %s18, 1
      %p53 = por %p51, %p52
      %p55 = scmp.ne.s32.totalorder %s38, %s54
      %p56 = scmp.eq.s32.totalorder %s18, 0
      %p57 = por %p55, %p56
      %s58 = ssub.s32 %s20, %s27
      %p59 = scmp.eq.s32.totalorder %s58, 0
      %s61 = sadd.s32 %s60, 1
      %s62 = scalar_select %p59, %s60, %s61
      %p65 = pneg %p59
      %p66 = scmp.eq.s32.totalorder %s12, 1
      %p67 = por %p65, %p66
      %p68 = scmp.ne.s32.totalorder %s60, %s63
      %p69 = scmp.eq.s32.totalorder %s12, 0
      %p70 = por %p68, %p69
      %p71 = scmp.ne.s32.totalorder %s60, %s63
      %p72 = scmp.eq.s32.totalorder %s17, 1
      %p73 = por %p71, %p72
      %p74 = scmp.ne.s32.totalorder %s63, %s64
      %p75 = scmp.eq.s32.totalorder %s17, 0
      %p76 = por %p74, %p75
      %p77 = scmp.ne.s32.totalorder %s63, %s64
      %p78 = scmp.eq.s32.totalorder %s18, 1
      %p79 = por %p77, %p78
      %p81 = scmp.ne.s32.totalorder %s64, %s80
      %p82 = scmp.eq.s32.totalorder %s18, 0
      %p83 = por %p81, %p82
      %s84 = ssub.s32 %s20, %s27
      %p85 = scmp.eq.s32.totalorder %s84, 0
      %s87 = sadd.s32 %s86, 1
      %s88 = scalar_select %p85, %s86, %s87
      %p91 = pneg %p85
      %p92 = scmp.eq.s32.totalorder %s12, 1
      %p93 = por %p91, %p92
      %p94 = scmp.ne.s32.totalorder %s86, %s89
      %p95 = scmp.eq.s32.totalorder %s12, 0
      %p96 = por %p94, %p95
      %p97 = scmp.ne.s32.totalorder %s86, %s89
      %p98 = scmp.eq.s32.totalorder %s17, 1
      %p99 = por %p97, %p98
      %p100 = scmp.ne.s32.totalorder %s89, %s90
      %p101 = scmp.eq.s32.totalorder %s17, 0
      %p102 = por %p100, %p101
      %p103 = scmp.ne.s32.totalorder %s89, %s90
      %p104 = scmp.eq.s32.totalorder %s18, 1
      %p105 = por %p103, %p104
      %p107 = scmp.ne.s32.totalorder %s90, %s106
      %p108 = scmp.eq.s32.totalorder %s18, 0
      %p109 = por %p107, %p108
      %s110 = ssub.s32 %s19, %s31
      %s111 = ssub.s32 %s20, %s27
      %s112 = sor.u32 %s110, %s111
      %p113 = scmp.eq.s32.totalorder %s112, 0
      %s115 = sadd.s32 %s114, 1
      %s116 = scalar_select %p113, %s114, %s115
      %p119 = pneg %p113
      %p120 = scmp.eq.s32.totalorder %s12, 1
      %p121 = por %p119, %p120
      %p122 = scmp.ne.s32.totalorder %s114, %s117
      %p123 = scmp.eq.s32.totalorder %s12, 0
      %p124 = por %p122, %p123
      %p125 = scmp.ne.s32.totalorder %s114, %s117
      %p126 = scmp.eq.s32.totalorder %s17, 1
      %p127 = por %p125, %p126
      %p128 = scmp.ne.s32.totalorder %s117, %s118
      %p129 = scmp.eq.s32.totalorder %s17, 0
      %p130 = por %p128, %p129
      %p131 = scmp.ne.s32.totalorder %s117, %s118
      %p132 = scmp.eq.s32.totalorder %s18, 1
      %p133 = por %p131, %p132
      %p135 = scmp.ne.s32.totalorder %s118, %s134
      %p136 = scmp.eq.s32.totalorder %s18, 0
      %p137 = por %p135, %p136
      %p138 = scmp.le.s32.totalorder 1, %s12
      %p139 = scmp.lt.s32.totalorder %s12, 3
      %p140 = pnand %p138, %p139
      %p141 = pneg %p140
      // Predicated region
      $region9: #{tpu_custom_call.1} parent=5 // pred_check
        _
      $region10: #{tpu_custom_call.1} parent=5 // pred_check_branch
        %143 = sbr.rel (%p140) target = $region12
      $region11: #{tpu_custom_call.1} parent=5 // pred_region
        %s144 = ssub.s32 %s12, 1
        // Predicated region
        $region13: #{tpu_custom_call.1} parent=11 // pred_check
          %p145 = pneg %p76
        $region14: #{tpu_custom_call.1} parent=11 // pred_check_branch
          %147 = sbr.rel (%p145) target = $region16
        $region15: #{tpu_custom_call.1} parent=11 // pred_region
          %s148 = smul.u32 2, %s22
          %p149 = scmp.lt.s32.totalorder %s148, 1
          %s150 = scalar_select %p149, %s148, 1
          %s151 = smul.addr %s150, 4
          %s152 = scalar_lea.vmem %s1, %s151
          %s153 = smul.u32 2, %s22
        $region16: #{tpu_custom_call.1} parent=11 // pred_fallthru
          _
        // Predicated region
        $region17: #{tpu_custom_call.1} parent=11 // pred_check
          %p154 = pneg %p102
        $region18: #{tpu_custom_call.1} parent=11 // pred_check_branch
          %156 = sbr.rel (%p154) target = $region20
        $region19: #{tpu_custom_call.1} parent=11 // pred_region
          %s157 = smul.u32 2, %s22
          %p158 = scmp.lt.s32.totalorder %s157, 1
          %s159 = scalar_select %p158, %s157, 1
          %s160 = scalar_lea.vmem %s2, %s159
          %s161 = smul.u32 2, %s22
        $region20: #{tpu_custom_call.1} parent=11 // pred_fallthru
          _
      $region12: #{tpu_custom_call.1} parent=5 // pred_fallthru
        _
      %p162 = scmp.lt.s32.totalorder %s12, 2
      // Predicated region
      $region21: #{tpu_custom_call.1} parent=5 // pred_check
        %p163 = pneg %p162
      $region22: #{tpu_custom_call.1} parent=5 // pred_check_branch
        %165 = sbr.rel (%p163) target = $region24
      $region23: #{tpu_custom_call.1} parent=5 // pred_region
        // Predicated region
        $region25: #{tpu_custom_call.1} parent=23 // pred_check
          %p166 = pneg %p44
        $region26: #{tpu_custom_call.1} parent=23 // pred_check_branch
          %168 = sbr.rel (%p166) target = $region28
        $region27: #{tpu_custom_call.1} parent=23 // pred_region
          %s169 = smul.u32 32, %s19
          %p170 = scmp.lt.s32.totalorder %s169, 63
          %s171 = scalar_select %p170, %s169, 63
          %s172 = smul.addr %s171, 4
          %s173 = scalar_lea.vmem %s0, %s172
          %s174 = smul.u32 32, %s19
        $region28: #{tpu_custom_call.1} parent=23 // pred_fallthru
          _
      $region24: #{tpu_custom_call.1} parent=5 // pred_fallthru
        _
      %p175 = scmp.le.s32.totalorder 1, %s12
      %p176 = scmp.lt.s32.totalorder %s12, 3
      %p177 = pnand %p175, %p176
      %p178 = pneg %p177
      // Predicated region
      $region29: #{tpu_custom_call.1} parent=5 // pred_check
        _
      $region30: #{tpu_custom_call.1} parent=5 // pred_check_branch
        %180 = sbr.rel (%p177) target = $region32
      $region31: #{tpu_custom_call.1} parent=5 // pred_region
        %s181 = ssub.s32 %s12, 1
        %s182 = smul.u32 32, %s21
        %p183 = scmp.lt.s32.totalorder %s182, 63
        %s184 = scalar_select %p183, %s182, 63
        %s185 = smul.addr %s184, 4
        %s186 = scalar_lea.vmem %s0, %s185
        %p187 = pneg %p50
        %p188 = pneg %p47
        %s189 = smul.u32 2, %s22
        %p190 = scmp.lt.s32.totalorder %s189, 1
        %s191 = scalar_select %p190, %s189, 1
        %s192 = smul.addr %s191, 4
        %s193 = scalar_lea.vmem %s1, %s192
        %p194 = pneg %p76
        %p195 = pneg %p73
        %s196 = smul.u32 2, %s22
        %p197 = scmp.lt.s32.totalorder %s196, 1
        %s198 = scalar_select %p197, %s196, 1
        %s199 = scalar_lea.vmem %s2, %s198
        %p200 = pneg %p102
        %p201 = pneg %p99
        %p202 = pneg %p130
        %p203 = pneg %p127
        %s204 = sand.u32 %s117, 1
        %s205 = scalar_lea.sflag [#allocation3], %s204
        %s206 = sand.u32 %s117, 1
        %s207 = smul.addr %s206, 256
        %s208 = scalar_lea.vmem [#allocation2], %s207
        %s209 = smul.u32 32, %s21
        %p210 = scmp.lt.s32.totalorder %s209, 63
        %s211 = scalar_select %p210, %s209, 63
        %s212 = smul.addr %s211, 4
        %s213 = scalar_lea.vmem %s0, %s212
        %s214 = smul.u32 32, %s21
        %s215 = smul.u32 2, %s22
        %p216 = scmp.lt.s32.totalorder %s215, 1
        %s217 = scalar_select %p216, %s215, 1
        %s218 = smul.addr %s217, 4
        %s219 = scalar_lea.vmem %s1, %s218
        %s220 = smul.u32 2, %s22
        %s221 = smul.u32 2, %s22
        %p222 = scmp.lt.s32.totalorder %s221, 1
        %s223 = scalar_select %p222, %s221, 1
        %s224 = scalar_lea.vmem %s2, %s223
        %s225 = smul.u32 2, %s22
        %s226 = smul.u32 32, %s21
        %s227 = smul.u32 2, %s22
        %v229 = vld [vmem:[%s213] sm:$0xf]
        %v230 = vld [vmem:[%s213 + $0x4] sm:$0xf]
        %v231 = vld [vmem:[%s213 + $0x8] sm:$0xf]
        %v232 = vld [vmem:[%s213 + $0xc] sm:$0xf]
        %v233 = vld [vmem:[%s213 + $0x10] sm:$0xf]
        %v234 = vld [vmem:[%s213 + $0x14] sm:$0xf]
        %v235 = vld [vmem:[%s213 + $0x18] sm:$0xf]
        %v236 = vld [vmem:[%s213 + $0x1c] sm:$0xf]
        %v237 = vld [vmem:[%s213 + $0x20] sm:$0xf]
        %v238 = vld [vmem:[%s213 + $0x24] sm:$0xf]
        %v239 = vld [vmem:[%s213 + $0x28] sm:$0xf]
        %v240 = vld [vmem:[%s213 + $0x2c] sm:$0xf]
        %v241 = vld [vmem:[%s213 + $0x30] sm:$0xf]
        %v242 = vld [vmem:[%s213 + $0x34] sm:$0xf]
        %v243 = vld [vmem:[%s213 + $0x38] sm:$0xf]
        %v244 = vld [vmem:[%s213 + $0x3c] sm:$0xf]
        %v245 = vld [vmem:[%s213 + $0x40] sm:$0xf]
        %v246 = vld [vmem:[%s213 + $0x44] sm:$0xf]
        %v247 = vld [vmem:[%s213 + $0x48] sm:$0xf]
        %v248 = vld [vmem:[%s213 + $0x4c] sm:$0xf]
        %v249 = vld [vmem:[%s213 + $0x50] sm:$0xf]
        %v250 = vld [vmem:[%s213 + $0x54] sm:$0xf]
        %v251 = vld [vmem:[%s213 + $0x58] sm:$0xf]
        %v252 = vld [vmem:[%s213 + $0x5c] sm:$0xf]
        %v253 = vld [vmem:[%s213 + $0x60] sm:$0xf]
        %v254 = vld [vmem:[%s213 + $0x64] sm:$0xf]
        %v255 = vld [vmem:[%s213 + $0x68] sm:$0xf]
        %v256 = vld [vmem:[%s213 + $0x6c] sm:$0xf]
        %v257 = vld [vmem:[%s213 + $0x70] sm:$0xf]
        %v258 = vld [vmem:[%s213 + $0x74] sm:$0xf]
        %v259 = vld [vmem:[%s213 + $0x78] sm:$0xf]
        %v260 = vld [vmem:[%s213 + $0x7c] sm:$0xf]
        %v261 = vld [vmem:[%s219] sm:$0xff]
        %v262 = vld [vmem:[%s219 + $0x8] sm:$0xff]
        %v263 = vld [vmem:[%s219 + $0x10] sm:$0xff]
        %v264 = vld [vmem:[%s219 + $0x18] sm:$0x33]
        %v265 = vld [vmem:[%s224] sm:$0x3]
        %v267 = vlaneseq
        %v268 = vshrl.u32 %v267, 7
        %v269 = vsub.s32 0, %v268
        %v270 = vrot.slane %v265, %v269
        %v271 = vlaneseq
        %v272 = vshrl.u32 %v271, 7
        %v273 = vsub.s32 1, %v272
        %v274 = vrot.slane %v265, %v273
        %v309 = vunpack.c.l.b16 %v229
        %v310 = vunpack.c.l.b16 %v230
        %v311 = vunpack.c.l.b16 %v231
        %v312 = vunpack.c.l.b16 %v232
        %v313 = vunpack.c.l.b16 %v233
        %v314 = vunpack.c.l.b16 %v234
        %v315 = vunpack.c.l.b16 %v235
        %v316 = vunpack.c.l.b16 %v236
        %v317 = vunpack.c.l.b16 %v237
        %v318 = vunpack.c.l.b16 %v238
        %v319 = vunpack.c.l.b16 %v239
        %v320 = vunpack.c.l.b16 %v240
        %v321 = vunpack.c.l.b16 %v241
        %v322 = vunpack.c.l.b16 %v242
        %v323 = vunpack.c.l.b16 %v243
        %v324 = vunpack.c.l.b16 %v244
        %v325 = vunpack.c.l.b16 %v245
        %v326 = vunpack.c.l.b16 %v246
        %v327 = vunpack.c.l.b16 %v247
        %v328 = vunpack.c.l.b16 %v248
        %v329 = vunpack.c.l.b16 %v249
        %v330 = vunpack.c.l.b16 %v250
        %v331 = vunpack.c.l.b16 %v251
        %v332 = vunpack.c.l.b16 %v252
        %v333 = vunpack.c.l.b16 %v253
        %v334 = vunpack.c.l.b16 %v254
        %v335 = vunpack.c.l.b16 %v255
        %v336 = vunpack.c.l.b16 %v256
        %v337 = vunpack.c.l.b16 %v257
        %v338 = vunpack.c.l.b16 %v258
        %v339 = vunpack.c.l.b16 %v259
        %v340 = vunpack.c.l.b16 %v260
        %v341 = vpack.c.b16 %v310, %v309
        %v342 = vpack.c.b16 %v312, %v311
        %v343 = vpack.c.b16 %v314, %v313
        %v344 = vpack.c.b16 %v316, %v315
        %v345 = vpack.c.b16 %v318, %v317
        %v346 = vpack.c.b16 %v320, %v319
        %v347 = vpack.c.b16 %v322, %v321
        %v348 = vpack.c.b16 %v324, %v323
        %v349 = vpack.c.b16 %v326, %v325
        %v350 = vpack.c.b16 %v328, %v327
        %v351 = vpack.c.b16 %v330, %v329
        %v352 = vpack.c.b16 %v332, %v331
        %v353 = vpack.c.b16 %v334, %v333
        %v354 = vpack.c.b16 %v336, %v335
        %v355 = vpack.c.b16 %v338, %v337
        %v356 = vpack.c.b16 %v340, %v339
        %v361 = vunpack.c.l.b16 %v261
        %v362 = vunpack.c.h.b16 %v261
        %v363 = vunpack.c.l.b16 %v262
        %v364 = vunpack.c.h.b16 %v262
        %v365 = vunpack.c.l.b16 %v263
        %v366 = vunpack.c.h.b16 %v263
        %v367 = vunpack.c.l.b16 %v264
        %v368 = vunpack.c.h.b16 %v264
        %v369 = vpack.c.b16 %v363, %v361
        %v370 = vpack.c.b16 %v364, %v362
        %v371 = vpack.c.b16 %v367, %v365
        %v372 = vpack.c.b16 %v368, %v366
        %vm375 = vcmask 220160
        %v377 = vsel %vm375, %v341, 0
        %v380 = vsel %vm375, %v342, 0
        %v383 = vsel %vm375, %v343, 0
        %v386 = vsel %vm375, %v344, 0
        %v389 = vsel %vm375, %v345, 0
        %v392 = vsel %vm375, %v346, 0
        %v395 = vsel %vm375, %v347, 0
        %v398 = vsel %vm375, %v348, 0
        %v401 = vsel %vm375, %v349, 0
        %v404 = vsel %vm375, %v350, 0
        %v407 = vsel %vm375, %v351, 0
        %v410 = vsel %vm375, %v352, 0
        %v413 = vsel %vm375, %v353, 0
        %v416 = vsel %vm375, %v354, 0
        %v419 = vsel %vm375, %v355, 0
        %v422 = vsel %vm375, %v356, 0
        %vm424 = vcmask 1044480
        %vm425 = vcmask 1045504
        %v426 = vsel %vm424, 4294967295, 65535
        %v427 = vsel %vm425, %v426, 0
        %v429 = vand.u32 %v371, %v427
        %v432 = vand.u32 %v372, %v427
        %434 = vmatprep.subr.bf16.mxu0 %v370
        %435 = vmatpush1.bf16.msra.mxu0 %v369
        %436 = vmatprep.subr.bf16.mxu0 %v432
        %437 = vmatpush1.bf16.msra.mxu0 %v429
        %438 = vmatprep.subr.bf16.mxu0 0
        %439 = vmatpush1.bf16.msra.mxu0 0
        %440 = vmatprep.subr.bf16.mxu0 0
        %441 = vmatpush1.bf16.msra.mxu0 0
        %442 = vmatprep.subr.bf16.mxu0 0
        %443 = vmatpush1.bf16.msra.mxu0 0
        %444 = vmatprep.subr.bf16.mxu0 0
        %445 = vmatpush1.bf16.msra.mxu0 0
        %446 = vmatprep.subr.bf16.mxu0 0
        %447 = vmatpush1.bf16.msra.mxu0 0
        %448 = vmatprep.subr.bf16.mxu0 0
        %449 = vmatpush1.bf16.msra.mxu0 0
        %450 = vmatprep.subr.bf16.mxu0 0
        %451 = vmatpush1.bf16.msra.mxu0 0
        %452 = vmatprep.subr.bf16.mxu0 0
        %453 = vmatpush1.bf16.msra.mxu0 0
        %454 = vmatprep.subr.bf16.mxu0 0
        %455 = vmatpush1.bf16.msra.mxu0 0
        %456 = vmatprep.subr.bf16.mxu0 0
        %457 = vmatpush1.bf16.msra.mxu0 0
        %458 = vmatprep.subr.bf16.mxu0 0
        %459 = vmatpush1.bf16.msra.mxu0 0
        %460 = vmatprep.subr.bf16.mxu0 0
        %461 = vmatpush1.bf16.msra.mxu0 0
        %462 = vmatprep.subr.bf16.mxu0 0
        %463 = vmatpush1.bf16.msra.mxu0 0
        %464 = vmatprep.subr.bf16.mxu0 0
        %465 = vmatpush1.bf16.msra.mxu0 0
        %466 = vmatprep.mubr.bf16.mxu0 0
        %467 = vmatmul.mubr.bf16.gmra.mrb[0].mxu0 %v377
        %v468 = vpop.f32.mrb[0].mxu0
        %v469 = vadd.f32 %v270, %v468
        %v470 = vpop.f32.mrb[0].mxu0
        %v471 = vadd.f32 %v274, %v470
        %v472 = vpop.f32.mrb[0].mxu0
        %v473 = vadd.f32 %v270, %v472
        %v474 = vpop.f32.mrb[0].mxu0
        %v475 = vadd.f32 %v274, %v474
        %476 = vmatprep.mubr.bf16.mxu0 0
        %477 = vmatmul.mubr.bf16.gmra.mrb[0].mxu0 %v380
        %v478 = vpop.f32.mrb[0].mxu0
        %v479 = vadd.f32 %v270, %v478
        %v480 = vpop.f32.mrb[0].mxu0
        %v481 = vadd.f32 %v274, %v480
        %v482 = vpop.f32.mrb[0].mxu0
        %v483 = vadd.f32 %v270, %v482
        %v484 = vpop.f32.mrb[0].mxu0
        %v485 = vadd.f32 %v274, %v484
        %486 = vmatprep.mubr.bf16.mxu0 0
        %487 = vmatmul.mubr.bf16.gmra.mrb[0].mxu0 %v383
        %v488 = vpop.f32.mrb[0].mxu0
        %v489 = vadd.f32 %v270, %v488
        %v490 = vpop.f32.mrb[0].mxu0
        %v491 = vadd.f32 %v274, %v490
        %v492 = vpop.f32.mrb[0].mxu0
        %v493 = vadd.f32 %v270, %v492
        %v494 = vpop.f32.mrb[0].mxu0
        %v495 = vadd.f32 %v274, %v494
        %496 = vmatprep.mubr.bf16.mxu0 0
        %497 = vmatmul.mubr.bf16.gmra.mrb[0].mxu0 %v386
        %v498 = vpop.f32.mrb[0].mxu0
        %v499 = vadd.f32 %v270, %v498
        %v500 = vpop.f32.mrb[0].mxu0
        %v501 = vadd.f32 %v274, %v500
        %v502 = vpop.f32.mrb[0].mxu0
        %v503 = vadd.f32 %v270, %v502
        %v504 = vpop.f32.mrb[0].mxu0
        %v505 = vadd.f32 %v274, %v504
        %506 = vmatprep.mubr.bf16.mxu0 0
        %507 = vmatmul.mubr.bf16.gmra.mrb[0].mxu0 %v389
        %v508 = vpop.f32.mrb[0].mxu0
        %v509 = vadd.f32 %v270, %v508
        %v510 = vpop.f32.mrb[0].mxu0
        %v511 = vadd.f32 %v274, %v510
        %v512 = vpop.f32.mrb[0].mxu0
        %v513 = vadd.f32 %v270, %v512
        %v514 = vpop.f32.mrb[0].mxu0
        %v515 = vadd.f32 %v274, %v514
        %516 = vmatprep.mubr.bf16.mxu0 0
        %517 = vmatmul.mubr.bf16.gmra.mrb[0].mxu0 %v392
        %v518 = vpop.f32.mrb[0].mxu0
        %v519 = vadd.f32 %v270, %v518
        %v520 = vpop.f32.mrb[0].mxu0
        %v521 = vadd.f32 %v274, %v520
        %v522 = vpop.f32.mrb[0].mxu0
        %v523 = vadd.f32 %v270, %v522
        %v524 = vpop.f32.mrb[0].mxu0
        %v525 = vadd.f32 %v274, %v524
        %526 = vmatprep.mubr.bf16.mxu0 0
        %527 = vmatmul.mubr.bf16.gmra.mrb[0].mxu0 %v395
        %v528 = vpop.f32.mrb[0].mxu0
        %v529 = vadd.f32 %v270, %v528
        %v530 = vpop.f32.mrb[0].mxu0
        %v531 = vadd.f32 %v274, %v530
        %v532 = vpop.f32.mrb[0].mxu0
        %v533 = vadd.f32 %v270, %v532
        %v534 = vpop.f32.mrb[0].mxu0
        %v535 = vadd.f32 %v274, %v534
        %536 = vmatprep.mubr.bf16.mxu0 0
        %537 = vmatmul.mubr.bf16.gmra.mrb[0].mxu0 %v398
        %v538 = vpop.f32.mrb[0].mxu0
        %v539 = vadd.f32 %v270, %v538
        %v540 = vpop.f32.mrb[0].mxu0
        %v541 = vadd.f32 %v274, %v540
        %v542 = vpop.f32.mrb[0].mxu0
        %v543 = vadd.f32 %v270, %v542
        %v544 = vpop.f32.mrb[0].mxu0
        %v545 = vadd.f32 %v274, %v544
        %546 = vmatprep.mubr.bf16.mxu0 0
        %547 = vmatmul.mubr.bf16.gmra.mrb[0].mxu0 %v401
        %v548 = vpop.f32.mrb[0].mxu0
        %v549 = vadd.f32 %v270, %v548
        %v550 = vpop.f32.mrb[0].mxu0
        %v551 = vadd.f32 %v274, %v550
        %v552 = vpop.f32.mrb[0].mxu0
        %v553 = vadd.f32 %v270, %v552
        %v554 = vpop.f32.mrb[0].mxu0
        %v555 = vadd.f32 %v274, %v554
        %556 = vmatprep.mubr.bf16.mxu0 0
        %557 = vmatmul.mubr.bf16.gmra.mrb[0].mxu0 %v404
        %v558 = vpop.f32.mrb[0].mxu0
        %v559 = vadd.f32 %v270, %v558
        %v560 = vpop.f32.mrb[0].mxu0
        %v561 = vadd.f32 %v274, %v560
        %v562 = vpop.f32.mrb[0].mxu0
        %v563 = vadd.f32 %v270, %v562
        %v564 = vpop.f32.mrb[0].mxu0
        %v565 = vadd.f32 %v274, %v564
        %566 = vmatprep.mubr.bf16.mxu0 0
        %567 = vmatmul.mubr.bf16.gmra.mrb[0].mxu0 %v407
        %v568 = vpop.f32.mrb[0].mxu0
        %v569 = vadd.f32 %v270, %v568
        %v570 = vpop.f32.mrb[0].mxu0
        %v571 = vadd.f32 %v274, %v570
        %v572 = vpop.f32.mrb[0].mxu0
        %v573 = vadd.f32 %v270, %v572
        %v574 = vpop.f32.mrb[0].mxu0
        %v575 = vadd.f32 %v274, %v574
        %576 = vmatprep.mubr.bf16.mxu0 0
        %577 = vmatmul.mubr.bf16.gmra.mrb[0].mxu0 %v410
        %v578 = vpop.f32.mrb[0].mxu0
        %v579 = vadd.f32 %v270, %v578
        %v580 = vpop.f32.mrb[0].mxu0
        %v581 = vadd.f32 %v274, %v580
        %v582 = vpop.f32.mrb[0].mxu0
        %v583 = vadd.f32 %v270, %v582
        %v584 = vpop.f32.mrb[0].mxu0
        %v585 = vadd.f32 %v274, %v584
        %586 = vmatprep.mubr.bf16.mxu0 0
        %587 = vmatmul.mubr.bf16.gmra.mrb[0].mxu0 %v413
        %v588 = vpop.f32.mrb[0].mxu0
        %v589 = vadd.f32 %v270, %v588
        %v590 = vpop.f32.mrb[0].mxu0
        %v591 = vadd.f32 %v274, %v590
        %v592 = vpop.f32.mrb[0].mxu0
        %v593 = vadd.f32 %v270, %v592
        %v594 = vpop.f32.mrb[0].mxu0
        %v595 = vadd.f32 %v274, %v594
        %596 = vmatprep.mubr.bf16.mxu0 0
        %597 = vmatmul.mubr.bf16.gmra.mrb[0].mxu0 %v416
        %v598 = vpop.f32.mrb[0].mxu0
        %v599 = vadd.f32 %v270, %v598
        %v600 = vpop.f32.mrb[0].mxu0
        %v601 = vadd.f32 %v274, %v600
        %v602 = vpop.f32.mrb[0].mxu0
        %v603 = vadd.f32 %v270, %v602
        %v604 = vpop.f32.mrb[0].mxu0
        %v605 = vadd.f32 %v274, %v604
        %606 = vmatprep.mubr.bf16.mxu0 0
        %607 = vmatmul.mubr.bf16.gmra.mrb[0].mxu0 %v419
        %v608 = vpop.f32.mrb[0].mxu0
        %v609 = vadd.f32 %v270, %v608
        %v610 = vpop.f32.mrb[0].mxu0
        %v611 = vadd.f32 %v274, %v610
        %v612 = vpop.f32.mrb[0].mxu0
        %v613 = vadd.f32 %v270, %v612
        %v614 = vpop.f32.mrb[0].mxu0
        %v615 = vadd.f32 %v274, %v614
        %616 = vmatprep.mubr.bf16.mxu0 0
        %617 = vmatmul.mubr.bf16.gmra.mrb[0].mxu0 %v422
        %v618 = vpop.f32.mrb[0].mxu0
        %v619 = vadd.f32 %v270, %v618
        %v620 = vpop.f32.mrb[0].mxu0
        %v621 = vadd.f32 %v274, %v620
        %v622 = vpop.f32.mrb[0].mxu0
        %v623 = vadd.f32 %v270, %v622
        %v624 = vpop.f32.mrb[0].mxu0
        %v625 = vadd.f32 %v274, %v624
        %626 = vdwg.mxu0
        %v627 = vmax.f32 %v469, 0.0
        %v628 = vmax.f32 %v471, 0.0
        %v629 = vmax.f32 %v473, 0.0
        %v630 = vmax.f32 %v475, 0.0
        %v631 = vmax.f32 %v479, 0.0
        %v632 = vmax.f32 %v481, 0.0
        %v633 = vmax.f32 %v483, 0.0
        %v634 = vmax.f32 %v485, 0.0
        %v635 = vmax.f32 %v489, 0.0
        %v636 = vmax.f32 %v491, 0.0
        %v637 = vmax.f32 %v493, 0.0
        %v638 = vmax.f32 %v495, 0.0
        %v639 = vmax.f32 %v499, 0.0
        %v640 = vmax.f32 %v501, 0.0
        %v641 = vmax.f32 %v503, 0.0
        %v642 = vmax.f32 %v505, 0.0
        %v643 = vmax.f32 %v509, 0.0
        %v644 = vmax.f32 %v511, 0.0
        %v645 = vmax.f32 %v513, 0.0
        %v646 = vmax.f32 %v515, 0.0
        %v647 = vmax.f32 %v519, 0.0
        %v648 = vmax.f32 %v521, 0.0
        %v649 = vmax.f32 %v523, 0.0
        %v650 = vmax.f32 %v525, 0.0
        %v651 = vmax.f32 %v529, 0.0
        %v652 = vmax.f32 %v531, 0.0
        %v653 = vmax.f32 %v533, 0.0
        %v654 = vmax.f32 %v535, 0.0
        %v655 = vmax.f32 %v539, 0.0
        %v656 = vmax.f32 %v541, 0.0
        %v657 = vmax.f32 %v543, 0.0
        %v658 = vmax.f32 %v545, 0.0
        %v659 = vmax.f32 %v549, 0.0
        %v660 = vmax.f32 %v551, 0.0
        %v661 = vmax.f32 %v553, 0.0
        %v662 = vmax.f32 %v555, 0.0
        %v663 = vmax.f32 %v559, 0.0
        %v664 = vmax.f32 %v561, 0.0
        %v665 = vmax.f32 %v563, 0.0
        %v666 = vmax.f32 %v565, 0.0
        %v667 = vmax.f32 %v569, 0.0
        %v668 = vmax.f32 %v571, 0.0
        %v669 = vmax.f32 %v573, 0.0
        %v670 = vmax.f32 %v575, 0.0
        %v671 = vmax.f32 %v579, 0.0
        %v672 = vmax.f32 %v581, 0.0
        %v673 = vmax.f32 %v583, 0.0
        %v674 = vmax.f32 %v585, 0.0
        %v675 = vmax.f32 %v589, 0.0
        %v676 = vmax.f32 %v591, 0.0
        %v677 = vmax.f32 %v593, 0.0
        %v678 = vmax.f32 %v595, 0.0
        %v679 = vmax.f32 %v599, 0.0
        %v680 = vmax.f32 %v601, 0.0
        %v681 = vmax.f32 %v603, 0.0
        %v682 = vmax.f32 %v605, 0.0
        %v683 = vmax.f32 %v609, 0.0
        %v684 = vmax.f32 %v611, 0.0
        %v685 = vmax.f32 %v613, 0.0
        %v686 = vmax.f32 %v615, 0.0
        %v687 = vmax.f32 %v619, 0.0
        %v688 = vmax.f32 %v621, 0.0
        %v689 = vmax.f32 %v623, 0.0
        %v690 = vmax.f32 %v625, 0.0
        %v691 = vpack.c.bf16 %v629, %v627
        %v692 = vpack.c.bf16 %v630, %v628
        %v693 = vpack.c.bf16 %v633, %v631
        %v694 = vpack.c.bf16 %v634, %v632
        %v695 = vpack.c.bf16 %v637, %v635
        %v696 = vpack.c.bf16 %v638, %v636
        %v697 = vpack.c.bf16 %v641, %v639
        %v698 = vpack.c.bf16 %v642, %v640
        %v699 = vpack.c.bf16 %v645, %v643
        %v700 = vpack.c.bf16 %v646, %v644
        %v701 = vpack.c.bf16 %v649, %v647
        %v702 = vpack.c.bf16 %v650, %v648
        %v703 = vpack.c.bf16 %v653, %v651
        %v704 = vpack.c.bf16 %v654, %v652
        %v705 = vpack.c.bf16 %v657, %v655
        %v706 = vpack.c.bf16 %v658, %v656
        %v707 = vpack.c.bf16 %v661, %v659
        %v708 = vpack.c.bf16 %v662, %v660
        %v709 = vpack.c.bf16 %v665, %v663
        %v710 = vpack.c.bf16 %v666, %v664
        %v711 = vpack.c.bf16 %v669, %v667
        %v712 = vpack.c.bf16 %v670, %v668
        %v713 = vpack.c.bf16 %v673, %v671
        %v714 = vpack.c.bf16 %v674, %v672
        %v715 = vpack.c.bf16 %v677, %v675
        %v716 = vpack.c.bf16 %v678, %v676
        %v717 = vpack.c.bf16 %v681, %v679
        %v718 = vpack.c.bf16 %v682, %v680
        %v719 = vpack.c.bf16 %v685, %v683
        %v720 = vpack.c.bf16 %v686, %v684
        %v721 = vpack.c.bf16 %v689, %v687
        %v722 = vpack.c.bf16 %v690, %v688
        %v755 = vunpack.c.l.b16 %v691
        %v756 = vunpack.c.l.b16 %v692
        %v757 = vunpack.c.h.b16 %v691
        %v758 = vunpack.c.h.b16 %v692
        %v759 = vunpack.c.l.b16 %v693
        %v760 = vunpack.c.l.b16 %v694
        %v761 = vunpack.c.h.b16 %v693
        %v762 = vunpack.c.h.b16 %v694
        %v763 = vunpack.c.l.b16 %v695
        %v764 = vunpack.c.l.b16 %v696
        %v765 = vunpack.c.h.b16 %v695
        %v766 = vunpack.c.h.b16 %v696
        %v767 = vunpack.c.l.b16 %v697
        %v768 = vunpack.c.l.b16 %v698
        %v769 = vunpack.c.h.b16 %v697
        %v770 = vunpack.c.h.b16 %v698
        %v771 = vunpack.c.l.b16 %v699
        %v772 = vunpack.c.l.b16 %v700
        %v773 = vunpack.c.h.b16 %v699
        %v774 = vunpack.c.h.b16 %v700
        %v775 = vunpack.c.l.b16 %v701
        %v776 = vunpack.c.l.b16 %v702
        %v777 = vunpack.c.h.b16 %v701
        %v778 = vunpack.c.h.b16 %v702
        %v779 = vunpack.c.l.b16 %v703
        %v780 = vunpack.c.l.b16 %v704
        %v781 = vunpack.c.h.b16 %v703
        %v782 = vunpack.c.h.b16 %v704
        %v783 = vunpack.c.l.b16 %v705
        %v784 = vunpack.c.l.b16 %v706
        %v785 = vunpack.c.h.b16 %v705
        %v786 = vunpack.c.h.b16 %v706
        %v787 = vunpack.c.l.b16 %v707
        %v788 = vunpack.c.l.b16 %v708
        %v789 = vunpack.c.h.b16 %v707
        %v790 = vunpack.c.h.b16 %v708
        %v791 = vunpack.c.l.b16 %v709
        %v792 = vunpack.c.l.b16 %v710
        %v793 = vunpack.c.h.b16 %v709
        %v794 = vunpack.c.h.b16 %v710
        %v795 = vunpack.c.l.b16 %v711
        %v796 = vunpack.c.l.b16 %v712
        %v797 = vunpack.c.h.b16 %v711
        %v798 = vunpack.c.h.b16 %v712
        %v799 = vunpack.c.l.b16 %v713
        %v800 = vunpack.c.l.b16 %v714
        %v801 = vunpack.c.h.b16 %v713
        %v802 = vunpack.c.h.b16 %v714
        %v803 = vunpack.c.l.b16 %v715
        %v804 = vunpack.c.l.b16 %v716
        %v805 = vunpack.c.h.b16 %v715
        %v806 = vunpack.c.h.b16 %v716
        %v807 = vunpack.c.l.b16 %v717
        %v808 = vunpack.c.l.b16 %v718
        %v809 = vunpack.c.h.b16 %v717
        %v810 = vunpack.c.h.b16 %v718
        %v811 = vunpack.c.l.b16 %v719
        %v812 = vunpack.c.l.b16 %v720
        %v813 = vunpack.c.h.b16 %v719
        %v814 = vunpack.c.h.b16 %v720
        %v815 = vunpack.c.l.b16 %v721
        %v816 = vunpack.c.l.b16 %v722
        %v817 = vunpack.c.h.b16 %v721
        %v818 = vunpack.c.h.b16 %v722
        %v819 = vpack.c.b16 %v756, %v755
        %v820 = vpack.c.b16 %v758, %v757
        %v821 = vpack.c.b16 %v760, %v759
        %v822 = vpack.c.b16 %v762, %v761
        %v823 = vpack.c.b16 %v764, %v763
        %v824 = vpack.c.b16 %v766, %v765
        %v825 = vpack.c.b16 %v768, %v767
        %v826 = vpack.c.b16 %v770, %v769
        %v827 = vpack.c.b16 %v772, %v771
        %v828 = vpack.c.b16 %v774, %v773
        %v829 = vpack.c.b16 %v776, %v775
        %v830 = vpack.c.b16 %v778, %v777
        %v831 = vpack.c.b16 %v780, %v779
        %v832 = vpack.c.b16 %v782, %v781
        %v833 = vpack.c.b16 %v784, %v783
        %v834 = vpack.c.b16 %v786, %v785
        %v835 = vpack.c.b16 %v788, %v787
        %v836 = vpack.c.b16 %v790, %v789
        %v837 = vpack.c.b16 %v792, %v791
        %v838 = vpack.c.b16 %v794, %v793
        %v839 = vpack.c.b16 %v796, %v795
        %v840 = vpack.c.b16 %v798, %v797
        %v841 = vpack.c.b16 %v800, %v799
        %v842 = vpack.c.b16 %v802, %v801
        %v843 = vpack.c.b16 %v804, %v803
        %v844 = vpack.c.b16 %v806, %v805
        %v845 = vpack.c.b16 %v808, %v807
        %v846 = vpack.c.b16 %v810, %v809
        %v847 = vpack.c.b16 %v812, %v811
        %v848 = vpack.c.b16 %v814, %v813
        %v849 = vpack.c.b16 %v816, %v815
        %v850 = vpack.c.b16 %v818, %v817
        %883 = vst [vmem:[%s208] sm:$0xff] %v819
        %884 = vst [vmem:[%s208 + $0x8] sm:$0xff] %v820
        %885 = vst [vmem:[%s208 + $0x10] sm:$0xff] %v821
        %886 = vst [vmem:[%s208 + $0x18] sm:$0xff] %v822
        %887 = vst [vmem:[%s208 + $0x20] sm:$0xff] %v823
        %888 = vst [vmem:[%s208 + $0x28] sm:$0xff] %v824
        %889 = vst [vmem:[%s208 + $0x30] sm:$0xff] %v825
        %890 = vst [vmem:[%s208 + $0x38] sm:$0xff] %v826
        %891 = vst [vmem:[%s208 + $0x40] sm:$0xff] %v827
        %892 = vst [vmem:[%s208 + $0x48] sm:$0xff] %v828
        %893 = vst [vmem:[%s208 + $0x50] sm:$0xff] %v829
        %894 = vst [vmem:[%s208 + $0x58] sm:$0xff] %v830
        %895 = vst [vmem:[%s208 + $0x60] sm:$0xff] %v831
        %896 = vst [vmem:[%s208 + $0x68] sm:$0xff] %v832
        %897 = vst [vmem:[%s208 + $0x70] sm:$0xff] %v833
        %898 = vst [vmem:[%s208 + $0x78] sm:$0xff] %v834
        %899 = vst [vmem:[%s208 + $0x80] sm:$0xff] %v835
        %900 = vst [vmem:[%s208 + $0x88] sm:$0xff] %v836
        %901 = vst [vmem:[%s208 + $0x90] sm:$0xff] %v837
        %902 = vst [vmem:[%s208 + $0x98] sm:$0xff] %v838
        %903 = vst [vmem:[%s208 + $0xa0] sm:$0xff] %v839
        %904 = vst [vmem:[%s208 + $0xa8] sm:$0xff] %v840
        %905 = vst [vmem:[%s208 + $0xb0] sm:$0xff] %v841
        %906 = vst [vmem:[%s208 + $0xb8] sm:$0xff] %v842
        %907 = vst [vmem:[%s208 + $0xc0] sm:$0xff] %v843
        %908 = vst [vmem:[%s208 + $0xc8] sm:$0xff] %v844
        %909 = vst [vmem:[%s208 + $0xd0] sm:$0xff] %v845
        %910 = vst [vmem:[%s208 + $0xd8] sm:$0xff] %v846
        %911 = vst [vmem:[%s208 + $0xe0] sm:$0xff] %v847
        %912 = vst [vmem:[%s208 + $0xe8] sm:$0xff] %v848
        %913 = vst [vmem:[%s208 + $0xf0] sm:$0xff] %v849
        %914 = vst [vmem:[%s208 + $0xf8] sm:$0xff] %v850
        %s915 = sand.u32 %s117, 1
        %s916 = scalar_lea.sflag [#allocation3], %s915
        %s917 = sand.u32 %s117, 1
        %s918 = smul.addr %s917, 256
        %s919 = scalar_lea.vmem [#allocation2], %s918
        // Predicated region
        $region33: #{tpu_custom_call.1} parent=31 // pred_check
          %p920 = pneg %p127
        $region34: #{tpu_custom_call.1} parent=31 // pred_check_branch
          %922 = sbr.rel (%p920) target = $region36
        $region35: #{tpu_custom_call.1} parent=31 // pred_region
          %s923 = smul.u32 32, %s21
          %s924 = smul.u32 2, %s22
          %s926 = ssub.s32 4096, 4096
          %927 = vsyncadd %s916, %s926
          %s928 = smul.addr %s923, 2
          %s929 = sadd.s32 %s924, %s928
          %s930 = smul.addr %s929, 64
          %s931 = scalar_lea.hbm %s3, %s930
          %s932 = sshll.u32 %s919, 4
          %s933 = int_to_ptr.vmem [resolvable:$true] %s932
          %938 = dma.vmem_to_hbm [thread:$0]  %s933, 4096, %s931, %s916, 128, 128, 8
        $region36: #{tpu_custom_call.1} parent=31 // pred_fallthru
          _
      $region32: #{tpu_custom_call.1} parent=5 // pred_fallthru
        _
      %p939 = scmp.le.s32.totalorder 2, %s12
      // Predicated region
      $region37: #{tpu_custom_call.1} parent=5 // pred_check
        %p940 = pneg %p939
      $region38: #{tpu_custom_call.1} parent=5 // pred_check_branch
        %942 = sbr.rel (%p940) target = $region40
      $region39: #{tpu_custom_call.1} parent=5 // pred_region
        %s943 = ssub.s32 %s12, 2
        // Predicated region
        $region41: #{tpu_custom_call.1} parent=39 // pred_check
          %p944 = pneg %p133
        $region42: #{tpu_custom_call.1} parent=39 // pred_check_branch
          %946 = sbr.rel (%p944) target = $region44
        $region43: #{tpu_custom_call.1} parent=39 // pred_region
          %s947 = sand.u32 %s118, 1
          %s948 = scalar_lea.sflag [#allocation3], %s947
          %s949 = sand.u32 %s118, 1
          %s950 = smul.addr %s949, 256
          %s951 = scalar_lea.vmem [#allocation2], %s950
          %952 = dma.done %s948, 4096
        $region44: #{tpu_custom_call.1} parent=39 // pred_fallthru
          _
      $region40: #{tpu_custom_call.1} parent=5 // pred_fallthru
        _
    $region6: #{tpu_custom_call.1} parent=1 // loop_footer
      %s16 = sadd.s32 1, %s12
    $region7: #{tpu_custom_call.1} parent=1 // loop_footer_branch
      %11 = sbr.rel target = $region3
    $region8: #{tpu_custom_call.1} parent=1 // loop_exit
      _
    %953 = vsyncpa [#allocation3], 1
    %s954 = scalar_lea.sflag [#allocation3], 1
    %955 = vsyncpa %s954, 1

</llo_original>
